<compile_context>
chip_gen: v6e
topology: v6e:2x2x1
jax: 0.10.0
libtpu: 0.0.40
codegen_flags: <defaults>
</compile_context>

<pallas_src>
import jax
import jax.numpy as jnp
import numpy as np
from jax.experimental import pallas as pl
from jax.experimental.pallas import tpu as pltpu

MAX_LENGTH = 10
EMBEDDING_DIM = 32
HIDDEN_DIM = 32
NUM_CLASSES = 2          # linearOut: hidden -> 2
LANES = 128              # TPU lane width; also 4 * HIDDEN_DIM (packed gate width)
OUT_LANES = 128          # packed output: [logp(2) | h'(32) | c'(32) | pad]
MAX_BLOCK_B = 512        # largest batch tile per grid step (sweeps show ~85% HBM roofline)


def _round_up(n, m):
    return ((n + m - 1) // m) * m


def _decoder_step_kernel(emb_ref, enc_ref, h0_ref, c0_ref,
                         w1_ref, w2_ref, b_ref, out_ref):
    f32 = jnp.float32
    bf16 = jnp.bfloat16
    bt = emb_ref.shape[0]            # batch tile
    E = emb_ref.shape[1]             # embedding dim (32)
    hd = c0_ref.shape[-1]            # hidden dim (32)

    bc = b_ref[0:1, :hd]             # (1, H)   combine bias          (f32)
    bl = b_ref[1:2, :]               # (1, 4H)  packed LSTM gate bias (f32)
    bout = b_ref[2:3, :]             # (1, 128) padded linearOut bias (f32)

    # --- attention_combine(cat([embedded, SUM_t enc_t])) + ReLU.
    #     The constant-ones attention (implicit-dim softmax over a size-1 dim) makes
    #     bmm == length-sum, which is folded into the MXU K dim of w1 (tiled wc_a),
    #     so two summed bf16 dots with f32 accumulation replace reduce+concat+dot.
    x = jnp.dot(emb_ref[...], w1_ref[:E, :], preferred_element_type=f32)
    x = x + jnp.dot(enc_ref[...], w1_ref[E:, :], preferred_element_type=f32)
    x = jnp.maximum(x + bc, 0.0)                                   # (bt, H) f32

    # --- one LSTM step; gates packed (i, f, o, g) across 4H = 128 lanes:
    #     two summed (bt,H)x(H,4H) bf16 MXU pushes compute every gate pre-activation.
    z = jnp.dot(x.astype(bf16), w2_ref[:hd, :], preferred_element_type=f32)
    z = z + jnp.dot(h0_ref[...], w2_ref[hd:2 * hd, :], preferred_element_type=f32)
    z = z + bl
    sig = jax.nn.sigmoid(z[:, :3 * hd])                            # i | f | o in one EUP pass
    i_g = sig[:, :hd]
    f_g = sig[:, hd:2 * hd]
    o_g = sig[:, 2 * hd:3 * hd]
    g_g = jnp.tanh(z[:, 3 * hd:])
    c_new = f_g * c0_ref[...] + i_g * g_g                          # f32 cell state
    h_new = o_g * jnp.tanh(c_new)

    # --- log_softmax(linearOut(h')): wout/bout zero-padded to 128 lanes
    #     (lane-dense matmul); softmax restricted to the 2 valid lanes via f32 mask.
    logits = jnp.dot(h_new.astype(bf16), w2_ref[2 * hd:3 * hd, :],
                     preferred_element_type=f32) + bout
    lane = jax.lax.broadcasted_iota(jnp.int32, logits.shape, 1)
    masked = jnp.where(lane < NUM_CLASSES, logits, -1e30)
    m = jnp.max(masked, axis=-1, keepdims=True)
    lse = m + jnp.log(jnp.sum(jnp.exp(masked - m), axis=-1, keepdims=True))
    logp2 = (logits - lse)[:, :NUM_CLASSES]

    # --- single unmasked, lane-dense 128-lane store: [logp | h' | c' | pad].
    out_ref[...] = jnp.concatenate(
        [logp2, h_new, c_new,
         jnp.zeros((bt, OUT_LANES - NUM_CLASSES - 2 * hd), f32)], axis=-1)


def attention_decoder_lstm_batched(emb, h0, c0, enc, packed, *, block_b=None):
    """B independent decode steps in one pallas_call; weights stay resident in VMEM."""
    E, H, ML = EMBEDDING_DIM, HIDDEN_DIM, MAX_LENGTH
    B = emb.shape[0]

    # Largest tile / fewest grid steps (single-TC v5e/v6e); capped at 512 rows so
    # realistic B yields >=2 "parallel" tiles for v7x's 2 TensorCores.
    if block_b is None:
        block_b = min(MAX_BLOCK_B, _round_up(B, 8))
    block_b = _round_up(block_b, 8)
    Bp = _round_up(B, block_b)

    enc2d = enc.reshape(B, ML * H)                     # lane-dense 2D encoder layout
    if Bp != B:
        pad = Bp - B
        emb = jnp.pad(emb, ((0, pad), (0, 0)))
        h0 = jnp.pad(h0, ((0, pad), (0, 0)))
        c0 = jnp.pad(c0, ((0, pad), (0, 0)))
        enc2d = jnp.pad(enc2d, ((0, pad), (0, 0)))

    # bf16 on the memory-bound read paths; c0 stays f32 for the gate/cell math.
    emb_bf = emb.astype(jnp.bfloat16)
    enc_bf = enc2d.astype(jnp.bfloat16)
    h0_bf = h0.astype(jnp.bfloat16)                    # h0 only feeds the MXU
    c0_f = c0.astype(jnp.float32)

    K1 = E + ML * H                                    # 352: folded combine K dim
    flops = 2 * Bp * (K1 * H + 2 * H * (4 * H) + H * LANES)
    bytes_accessed = (2 * Bp * (E + ML * H + H)        # bf16 inputs
                      + 4 * Bp * H                     # f32 c0
                      + 4 * Bp * OUT_LANES             # f32 packed output
                      + 2 * (K1 * H + 3 * H * LANES)   # bf16 resident weights
                      + 4 * 8 * LANES)                 # f32 bias slab
    cost = pl.CostEstimate(flops=flops,
                           transcendentals=Bp * (5 * H + LANES),
                           bytes_accessed=bytes_accessed)

    out = pl.pallas_call(
        _decoder_step_kernel,
        out_shape=jax.ShapeDtypeStruct((Bp, OUT_LANES), jnp.float32),
        grid=(Bp // block_b,),
        in_specs=[
            pl.BlockSpec((block_b, E), lambda b: (b, 0)),          # embedded (bf16)
            pl.BlockSpec((block_b, ML * H), lambda b: (b, 0)),     # encoder outputs, flat (bf16)
            pl.BlockSpec((block_b, H), lambda b: (b, 0)),          # h0 (bf16)
            pl.BlockSpec((block_b, H), lambda b: (b, 0)),          # c0 (f32)
            pl.BlockSpec((K1, H), lambda b: (0, 0)),               # w1 = [wc_e ; tile(wc_a, ML)] (resident)
            pl.BlockSpec((3 * H, LANES), lambda b: (0, 0)),        # w2 = [wl_x ; wl_h ; wout_pad] (resident)
            pl.BlockSpec((8, LANES), lambda b: (0, 0)),            # bias slab [bc | bl | bout | 0] (resident)
        ],
        out_specs=pl.BlockSpec((block_b, OUT_LANES), lambda b: (b, 0)),
        compiler_params=pltpu.CompilerParams(
            dimension_semantics=("parallel",)),                    # shards batch tiles across TCs on v7x
        cost_estimate=cost,
    )(emb_bf, enc_bf, h0_bf, c0_f, packed["w1"], packed["w2"], packed["b"])

    out = out[:B]
    logp = out[:, :NUM_CLASSES]
    h_new = out[:, NUM_CLASSES:NUM_CLASSES + H]
    c_new = out[:, NUM_CLASSES + H:NUM_CLASSES + 2 * H]
    # Attention weights are a compile-time constant (implicit-dim softmax over a
    # size-1 dim) -> emitted here instead of being written from the kernel.
    attn = jnp.ones((B, ML), jnp.float32)
    return logp, (h_new, c_new), attn


def attention_decoder_lstm(inputs, hidden, encoder_outputs, packed):
    """Mirrors AttentionDecoderLSTM.forward(inputs, hidden, encoder_outputs)."""
    E, H, ML = EMBEDDING_DIM, HIDDEN_DIM, MAX_LENGTH
    emb = inputs.reshape(1, E).astype(jnp.float32)
    h0 = hidden[0].reshape(1, H).astype(jnp.float32)
    c0 = hidden[1].reshape(1, H).astype(jnp.float32)
    enc = encoder_outputs.reshape(1, ML, H).astype(jnp.float32)
    # TODO(synk): a true multi-step decode loop (time as an "arbitrary" grid axis /
    # fori_loop with h/c carried in VMEM scratch and weights resident) needs the
    # autoregressive input-feeding policy, which forward() does not define;
    # batching independent steps (attention_decoder_lstm_batched) is what the module allows.
    logp, (hn, cn), attn = attention_decoder_lstm_batched(emb, h0, c0, enc, packed)
    return logp, (hn.reshape(1, 1, H), cn.reshape(1, 1, H)), attn.reshape(1, 1, ML)


def init_params(key):
    """Synthetic parameters with PyTorch-style uniform init (natural layout)."""
    E, H = EMBEDDING_DIM, HIDDEN_DIM
    keys = jax.random.split(key, 9)

    def u(k, shape, fan_in):
        b = 1.0 / np.sqrt(fan_in)
        return jax.random.uniform(k, shape, jnp.float32, -b, b)

    # The attention Linear (hidden+emb -> MAX_LENGTH) is mathematically dead: the
    # implicit-dim softmax normalizes a size-1 dim, so the attention weights are
    # identically 1.0 regardless of its parameters -> not materialized.
    return {
        "wc_e": u(keys[0], (E, H), E + H),      # attention_combine.weight[:, :E]^T
        "wc_a": u(keys[1], (H, H), E + H),      # attention_combine.weight[:, E:]^T
        "bc":   u(keys[2], (1, H), E + H),
        "wih":  u(keys[3], (4, H, H), H),       # LSTM W_ih^T, gate order (i, f, g, o)
        "whh":  u(keys[4], (4, H, H), H),       # LSTM W_hh^T
        "bg":   u(keys[5], (4, 1, H), H) + u(keys[6], (4, 1, H), H),   # b_ih + b_hh
        "wout": u(keys[7], (H, NUM_CLASSES), H),   # linearOut.weight^T
        "bout": u(keys[8], (1, NUM_CLASSES), H),
    }


def pack_params(p):
    """Repack natural-layout params into the fused / lane-dense / bf16 kernel layout."""
    E, H, ML = EMBEDDING_DIM, HIDDEN_DIM, MAX_LENGTH
    order = (0, 1, 3, 2)     # (i, f, g, o) -> (i, f, o, g): sigmoid gates lane-contiguous
    wih = jnp.concatenate([p["wih"][k] for k in order], axis=1)      # (H, 4H)
    whh = jnp.concatenate([p["whh"][k] for k in order], axis=1)      # (H, 4H)
    bl = jnp.concatenate([p["bg"][k] for k in order], axis=1)        # (1, 4H) = (1, 128)
    pad = LANES - NUM_CLASSES
    wout_pad = jnp.pad(p["wout"], ((0, 0), (0, pad)))                # (H, 128)
    bout_pad = jnp.pad(p["bout"], ((0, 0), (0, pad)))                # (1, 128)
    bc_pad = jnp.pad(p["bc"], ((0, 0), (0, LANES - H)))              # (1, 128)

    # w1 folds the (constant-ones) attention length-sum into the combine matmul's K.
    w1 = jnp.concatenate([p["wc_e"], jnp.tile(p["wc_a"], (ML, 1))], axis=0)   # (E+ML*H, H)
    # w2 stacks the packed LSTM input/hidden weights and the padded output head.
    w2 = jnp.concatenate([wih, whh, wout_pad], axis=0)               # (3H, 128) = (96, 128)
    # One resident bias slab (8, 128): rows = [bc | bl | bout | zeros...].
    biases = jnp.concatenate(
        [bc_pad, bl, bout_pad, jnp.zeros((5, LANES), jnp.float32)], axis=0)

    return {
        "w1": w1.astype(jnp.bfloat16),        # MXU operand -> bf16 (f32 accumulation)
        "w2": w2.astype(jnp.bfloat16),
        "b": biases.astype(jnp.float32),      # biases stay f32 (post-accumulation add)
    }


def reference_forward(emb, h0, c0, enc, raw):
    """Pure-JAX f32 reference with identical semantics (batched over the leading dim)."""
    attn = jnp.ones((emb.shape[0], enc.shape[1]), jnp.float32)   # implicit-dim softmax
    applied = jnp.einsum("bm,bmh->bh", attn, enc)
    x = jax.nn.relu(emb @ raw["wc_e"] + applied @ raw["wc_a"] + raw["bc"])
    g = [x @ raw["wih"][k] + h0 @ raw["whh"][k] + raw["bg"][k] for k in range(4)]
    i_g, f_g, g_g, o_g = g
    c_new = jax.nn.sigmoid(f_g) * c0 + jax.nn.sigmoid(i_g) * jnp.tanh(g_g)
    h_new = jax.nn.sigmoid(o_g) * jnp.tanh(c_new)
    logp = jax.nn.log_softmax(h_new @ raw["wout"] + raw["bout"], axis=-1)
    return logp, (h_new, c_new), attn


if __name__ == "__main__":
    E, H, ML = EMBEDDING_DIM, HIDDEN_DIM, MAX_LENGTH
    key = jax.random.PRNGKey(0)
    kp, ki, kh, kc, ke, kb0, kb1, kb2, kb3 = jax.random.split(key, 9)

    raw = init_params(kp)
    packed = pack_params(raw)

    # --- 1) module-exact single decode step (batch 1, shapes as in forward()) ----
    inputs = jax.random.normal(ki, (1, 1, E), jnp.float32)
    h0 = jax.random.normal(kh, (1, 1, H), jnp.float32)
    c0 = jax.random.normal(kc, (1, 1, H), jnp.float32)
    enc = jax.random.normal(ke, (ML, H), jnp.float32)

    logp, (hn, cn), attn = attention_decoder_lstm(inputs, (h0, c0), enc, packed)
    jax.block_until_ready((logp, hn, cn, attn))

    r_logp, (r_hn, r_cn), r_attn = reference_forward(
        inputs.reshape(1, E), h0.reshape(1, H), c0.reshape(1, H),
        enc.reshape(1, ML, H), raw)
    np.testing.assert_allclose(np.asarray(logp), np.asarray(r_logp), rtol=2e-2, atol=2e-2)
    np.testing.assert_allclose(np.asarray(hn).reshape(1, H), np.asarray(r_hn),
                               rtol=2e-2, atol=2e-2)
    np.testing.assert_allclose(np.asarray(cn).reshape(1, H), np.asarray(r_cn),
                               rtol=2e-2, atol=2e-2)
    np.testing.assert_allclose(np.asarray(attn).reshape(1, ML), np.asarray(r_attn),
                               rtol=1e-6, atol=1e-6)

    # --- 2) batched path: 16 independent decode steps in ONE pallas_call ---------
    B = 16
    b_emb = jax.random.normal(kb0, (B, E), jnp.float32)
    b_h0 = jax.random.normal(kb1, (B, H), jnp.float32)
    b_c0 = jax.random.normal(kb2, (B, H), jnp.float32)
    b_enc = jax.random.normal(kb3, (B, ML, H), jnp.float32)

    b_logp, (b_hn, b_cn), b_attn = attention_decoder_lstm_batched(
        b_emb, b_h0, b_c0, b_enc, packed)
    jax.block_until_ready((b_logp, b_hn, b_cn, b_attn))

    rb_logp, (rb_hn, rb_cn), rb_attn = reference_forward(b_emb, b_h0, b_c0, b_enc, raw)
    np.testing.assert_allclose(np.asarray(b_logp), np.asarray(rb_logp), rtol=2e-2, atol=2e-2)
    np.testing.assert_allclose(np.asarray(b_hn), np.asarray(rb_hn), rtol=2e-2, atol=2e-2)
    np.testing.assert_allclose(np.asarray(b_cn), np.asarray(rb_cn), rtol=2e-2, atol=2e-2)
    np.testing.assert_allclose(np.asarray(b_attn), np.asarray(rb_attn), rtol=1e-6, atol=1e-6)

    print("KERNEL_OK")
</pallas_src>

<mosaic_0001>
module attributes {stable_mosaic.version = 11 : i64} {
  func.func @_decoder_step_kernel(%arg0: i32, %arg1: memref<8x32xbf16, #tpu.memory_space<vmem>>, %arg2: memref<8x320xbf16, #tpu.memory_space<vmem>>, %arg3: memref<8x32xbf16, #tpu.memory_space<vmem>>, %arg4: memref<8x32xf32, #tpu.memory_space<vmem>>, %arg5: memref<352x32xbf16, #tpu.memory_space<vmem>>, %arg6: memref<96x128xbf16, #tpu.memory_space<vmem>>, %arg7: memref<8x128xf32, #tpu.memory_space<vmem>>, %arg8: memref<8x128xf32, #tpu.memory_space<vmem>>) attributes {dimension_semantics = [#tpu.dimension_semantics<parallel>], iteration_bounds = array<i64: 1>, scalar_prefetch = 0 : i64, scratch_operands = 0 : i64, tpu.core_type = #tpu.core_type<tc>, window_params = [{transform_indices = @transform_0, window_bounds = array<i64: 8, 32>}, {transform_indices = @transform_1, window_bounds = array<i64: 8, 320>}, {transform_indices = @transform_2, window_bounds = array<i64: 8, 32>}, {transform_indices = @transform_3, window_bounds = array<i64: 8, 32>}, {pipeline_mode = #tpu.pipeline_mode<synchronous>, transform_indices = @transform_4, window_bounds = array<i64: 352, 32>}, {pipeline_mode = #tpu.pipeline_mode<synchronous>, transform_indices = @transform_5, window_bounds = array<i64: 96, 128>}, {pipeline_mode = #tpu.pipeline_mode<synchronous>, transform_indices = @transform_6, window_bounds = array<i64: 8, 128>}, {transform_indices = @transform_7, window_bounds = array<i64: 8, 128>}]} {
    %c0 = arith.constant 0 : index
    %c0_0 = arith.constant 0 : index
    %0 = vector.load %arg7[%c0, %c0_0] : memref<8x128xf32, #tpu.memory_space<vmem>>, vector<1x32xf32>
    %c1 = arith.constant 1 : index
    %c0_1 = arith.constant 0 : index
    %1 = vector.load %arg7[%c1, %c0_1] : memref<8x128xf32, #tpu.memory_space<vmem>>, vector<1x128xf32>
    %c2 = arith.constant 2 : index
    %c0_2 = arith.constant 0 : index
    %2 = vector.load %arg7[%c2, %c0_2] : memref<8x128xf32, #tpu.memory_space<vmem>>, vector<1x128xf32>
    %c0_3 = arith.constant 0 : index
    %c0_4 = arith.constant 0 : index
    %3 = vector.load %arg1[%c0_3, %c0_4] : memref<8x32xbf16, #tpu.memory_space<vmem>>, vector<8x32xbf16>
    %c0_5 = arith.constant 0 : index
    %c0_6 = arith.constant 0 : index
    %4 = vector.load %arg5[%c0_5, %c0_6] : memref<352x32xbf16, #tpu.memory_space<vmem>>, vector<32x32xbf16>
    %cst = arith.constant dense<0.000000e+00> : vector<8x32xf32>
    %5 = tpu.matmul %3, %4, %cst {dimension_numbers = #tpu.dot_dimension_numbers<[1], [0], [0], [1], [0, 0, 1, 1], [], []>} : vector<8x32xbf16>, vector<32x32xbf16>, vector<8x32xf32> -> vector<8x32xf32>
    %c0_7 = arith.constant 0 : index
    %c0_8 = arith.constant 0 : index
    %6 = vector.load %arg2[%c0_7, %c0_8] : memref<8x320xbf16, #tpu.memory_space<vmem>>, vector<8x320xbf16>
    %c32 = arith.constant 32 : index
    %c0_9 = arith.constant 0 : index
    %7 = vector.load %arg5[%c32, %c0_9] : memref<352x32xbf16, #tpu.memory_space<vmem>>, vector<320x32xbf16>
    %cst_10 = arith.constant dense<0.000000e+00> : vector<8x32xf32>
    %8 = tpu.matmul %6, %7, %cst_10 {dimension_numbers = #tpu.dot_dimension_numbers<[1], [0], [0], [1], [0, 0, 1, 1], [], []>} : vector<8x320xbf16>, vector<320x32xbf16>, vector<8x32xf32> -> vector<8x32xf32>
    %9 = arith.addf %5, %8 : vector<8x32xf32>
    %10 = vector.broadcast %0 : vector<1x32xf32> to vector<8x32xf32>
    %11 = arith.addf %9, %10 : vector<8x32xf32>
    %cst_11 = arith.constant 0.000000e+00 : f32
    %12 = vector.broadcast %cst_11 : f32 to vector<8x32xf32>
    %13 = arith.maximumf %11, %12 : vector<8x32xf32>
    %14 = arith.truncf %13 : vector<8x32xf32> to vector<8x32xbf16>
    %c0_12 = arith.constant 0 : index
    %c0_13 = arith.constant 0 : index
    %15 = vector.load %arg6[%c0_12, %c0_13] : memref<96x128xbf16, #tpu.memory_space<vmem>>, vector<32x128xbf16>
    %cst_14 = arith.constant dense<0.000000e+00> : vector<8x128xf32>
    %16 = tpu.matmul %14, %15, %cst_14 {dimension_numbers = #tpu.dot_dimension_numbers<[1], [0], [0], [1], [0, 0, 1, 1], [], []>} : vector<8x32xbf16>, vector<32x128xbf16>, vector<8x128xf32> -> vector<8x128xf32>
    %c0_15 = arith.constant 0 : index
    %c0_16 = arith.constant 0 : index
    %17 = vector.load %arg3[%c0_15, %c0_16] : memref<8x32xbf16, #tpu.memory_space<vmem>>, vector<8x32xbf16>
    %c32_17 = arith.constant 32 : index
    %c0_18 = arith.constant 0 : index
    %18 = vector.load %arg6[%c32_17, %c0_18] : memref<96x128xbf16, #tpu.memory_space<vmem>>, vector<32x128xbf16>
    %cst_19 = arith.constant dense<0.000000e+00> : vector<8x128xf32>
    %19 = tpu.matmul %17, %18, %cst_19 {dimension_numbers = #tpu.dot_dimension_numbers<[1], [0], [0], [1], [0, 0, 1, 1], [], []>} : vector<8x32xbf16>, vector<32x128xbf16>, vector<8x128xf32> -> vector<8x128xf32>
    %20 = arith.addf %16, %19 : vector<8x128xf32>
    %21 = vector.broadcast %1 : vector<1x128xf32> to vector<8x128xf32>
    %22 = arith.addf %20, %21 : vector<8x128xf32>
    %23 = vector.extract_strided_slice %22 {offsets = [0, 0], sizes = [8, 96], strides = [1, 1]} : vector<8x128xf32> to vector<8x96xf32>
    %24 = arith.negf %23 : vector<8x96xf32>
    %25 = math.exp %24 : vector<8x96xf32>
    %cst_20 = arith.constant 1.000000e+00 : f32
    %26 = vector.broadcast %cst_20 : f32 to vector<8x96xf32>
    %27 = arith.addf %26, %25 : vector<8x96xf32>
    %28 = arith.divf %26, %27 : vector<8x96xf32>
    %29 = vector.extract_strided_slice %28 {offsets = [0, 0], sizes = [8, 32], strides = [1, 1]} : vector<8x96xf32> to vector<8x32xf32>
    %30 = vector.extract_strided_slice %28 {offsets = [0, 32], sizes = [8, 32], strides = [1, 1]} : vector<8x96xf32> to vector<8x32xf32>
    %31 = vector.extract_strided_slice %28 {offsets = [0, 64], sizes = [8, 32], strides = [1, 1]} : vector<8x96xf32> to vector<8x32xf32>
    %32 = vector.extract_strided_slice %22 {offsets = [0, 96], sizes = [8, 32], strides = [1, 1]} : vector<8x128xf32> to vector<8x32xf32>
    %33 = math.tanh %32 : vector<8x32xf32>
    %c0_21 = arith.constant 0 : index
    %c0_22 = arith.constant 0 : index
    %34 = vector.load %arg4[%c0_21, %c0_22] : memref<8x32xf32, #tpu.memory_space<vmem>>, vector<8x32xf32>
    %35 = arith.mulf %30, %34 : vector<8x32xf32>
    %36 = arith.mulf %29, %33 : vector<8x32xf32>
    %37 = arith.addf %35, %36 : vector<8x32xf32>
    %38 = math.tanh %37 : vector<8x32xf32>
    %39 = arith.mulf %31, %38 : vector<8x32xf32>
    %40 = arith.truncf %39 : vector<8x32xf32> to vector<8x32xbf16>
    %c64 = arith.constant 64 : index
    %c0_23 = arith.constant 0 : index
    %41 = vector.load %arg6[%c64, %c0_23] : memref<96x128xbf16, #tpu.memory_space<vmem>>, vector<32x128xbf16>
    %cst_24 = arith.constant dense<0.000000e+00> : vector<8x128xf32>
    %42 = tpu.matmul %40, %41, %cst_24 {dimension_numbers = #tpu.dot_dimension_numbers<[1], [0], [0], [1], [0, 0, 1, 1], [], []>} : vector<8x32xbf16>, vector<32x128xbf16>, vector<8x128xf32> -> vector<8x128xf32>
    %43 = vector.broadcast %2 : vector<1x128xf32> to vector<8x128xf32>
    %44 = arith.addf %42, %43 : vector<8x128xf32>
    %45 = tpu.iota {dimensions = array<i32: 1>} : vector<8x128xi32>
    %c2_i32 = arith.constant 2 : i32
    %46 = vector.broadcast %c2_i32 : i32 to vector<8x128xi32>
    %47 = arith.cmpi slt, %45, %46 : vector<8x128xi32>
    %cst_25 = arith.constant -1.000000e+30 : f32
    %48 = vector.broadcast %cst_25 : f32 to vector<8x128xf32>
    %49 = arith.select %47, %44, %48 : vector<8x128xi1>, vector<8x128xf32>
    %cst_26 = arith.constant dense<0xFF800000> : vector<8xf32>
    %50 = vector.multi_reduction <maximumf>, %49, %cst_26 [1] : vector<8x128xf32> to vector<8xf32>
    %51 = vector.shape_cast %50 : vector<8xf32> to vector<8x1xf32>
    %52 = vector.broadcast %51 : vector<8x1xf32> to vector<8x128xf32>
    %53 = arith.subf %49, %52 : vector<8x128xf32>
    %54 = math.exp %53 : vector<8x128xf32>
    %cst_27 = arith.constant dense<0.000000e+00> : vector<8xf32>
    %55 = vector.multi_reduction <add>, %54, %cst_27 [1] : vector<8x128xf32> to vector<8xf32>
    %56 = vector.shape_cast %55 : vector<8xf32> to vector<8x1xf32>
    %57 = math.log %56 : vector<8x1xf32>
    %58 = arith.addf %51, %57 : vector<8x1xf32>
    %59 = vector.broadcast %58 : vector<8x1xf32> to vector<8x128xf32>
    %60 = arith.subf %44, %59 : vector<8x128xf32>
    %61 = vector.extract_strided_slice %60 {offsets = [0, 0], sizes = [8, 2], strides = [1, 1]} : vector<8x128xf32> to vector<8x2xf32>
    %cst_28 = arith.constant 0.000000e+00 : f32
    %62 = vector.broadcast %cst_28 : f32 to vector<8x62xf32>
    %63 = tpu.concatenate %61, %39, %37, %62 in 1 : vector<8x2xf32>, vector<8x32xf32>, vector<8x32xf32>, vector<8x62xf32> -> vector<8x128xf32>
    %c0_29 = arith.constant 0 : index
    %c0_30 = arith.constant 0 : index
    %64 = vector.load %arg8[%c0_29, %c0_30] : memref<8x128xf32, #tpu.memory_space<vmem>>, vector<8x128xf32>
    tpu.vector_store %arg8[%c0_29, %c0_30], %63 {strides = array<i32>} : memref<8x128xf32, #tpu.memory_space<vmem>>, vector<8x128xf32>,
    return
  }
  func.func @transform_0(%arg0: i32) -> (i32, i32) {
    %c0_i32 = arith.constant 0 : i32
    %c0_i32_0 = arith.constant 0 : i32
    return %arg0, %c0_i32 : i32, i32
  }
  func.func @transform_1(%arg0: i32) -> (i32, i32) {
    %c0_i32 = arith.constant 0 : i32
    %c0_i32_0 = arith.constant 0 : i32
    return %arg0, %c0_i32 : i32, i32
  }
  func.func @transform_2(%arg0: i32) -> (i32, i32) {
    %c0_i32 = arith.constant 0 : i32
    %c0_i32_0 = arith.constant 0 : i32
    return %arg0, %c0_i32 : i32, i32
  }
  func.func @transform_3(%arg0: i32) -> (i32, i32) {
    %c0_i32 = arith.constant 0 : i32
    %c0_i32_0 = arith.constant 0 : i32
    return %arg0, %c0_i32 : i32, i32
  }
  func.func @transform_4(%arg0: i32) -> (i32, i32) {
    %c0_i32 = arith.constant 0 : i32
    %c0_i32_0 = arith.constant 0 : i32
    %c0_i32_1 = arith.constant 0 : i32
    return %c0_i32, %c0_i32_0 : i32, i32
  }
  func.func @transform_5(%arg0: i32) -> (i32, i32) {
    %c0_i32 = arith.constant 0 : i32
    %c0_i32_0 = arith.constant 0 : i32
    %c0_i32_1 = arith.constant 0 : i32
    return %c0_i32, %c0_i32_0 : i32, i32
  }
  func.func @transform_6(%arg0: i32) -> (i32, i32) {
    %c0_i32 = arith.constant 0 : i32
    %c0_i32_0 = arith.constant 0 : i32
    %c0_i32_1 = arith.constant 0 : i32
    return %c0_i32, %c0_i32_0 : i32, i32
  }
  func.func @transform_7(%arg0: i32) -> (i32, i32) {
    %c0_i32 = arith.constant 0 : i32
    %c0_i32_0 = arith.constant 0 : i32
    return %arg0, %c0_i32 : i32, i32
  }
}

</mosaic_0001>

<llo_original>
// kernel: tpu_custom_call.1
$region0: #{tpu_custom_call.1}
  #allocation0 [shape = 'u32[]', space=smem, size = 0x4, offset = 0x4, fixed_abs, tag = 'smem constant byte address 0x4 - core index']
  #allocation1 [shape = 'u32[144,128]{1,0:T(1,128)}', space=vmem, size = 0x12000, scoped, tag = 'internal scratch']
  %s0 = inlined_call_operand.vmem [shape: bf16[8,32], index: 0, kind: input, shape index: {}]
  %s1 = inlined_call_operand.vmem [shape: bf16[8,320], index: 1, kind: input, shape index: {}]
  %s2 = inlined_call_operand.vmem [shape: bf16[8,32], index: 2, kind: input, shape index: {}]
  %s3 = inlined_call_operand.vmem [shape: f32[8,32], index: 3, kind: input, shape index: {}]
  %s4 = inlined_call_operand.vmem [shape: bf16[352,32], index: 4, kind: input, shape index: {}]
  %s5 = inlined_call_operand.vmem [shape: bf16[96,128], index: 5, kind: input, shape index: {}]
  %s6 = inlined_call_operand.vmem [shape: f32[8,128], index: 6, kind: input, shape index: {}]
  %s7 = inlined_call_operand.hbm [shape: f32[8,128], index: 7, kind: output, shape index: {}]
  %s8 = sld [smem:[#allocation0]]
  $region38: #{tpu_custom_call.1} parent=0
    _
  %s10 = ssub.s32 1, %s8
  %s11 = scalar_select 0, %s10, %s8
  $region1: #{tpu_custom_call.1} parent=0
    #allocation2 [shape = 'u8[4096]{0}', space=vmem, size = 0x1000, scoped, tag = 'output window, operand 0, single buffered']
    #allocation3 [shape = 's32[1]{0}', space=sflag, size = 0x4, scoped, tag = 'scoped memory for tpu_custom_call.1']
    %12 = vsyncpa [#allocation3], 0
    // Predicated region
    $region2: #{tpu_custom_call.1} parent=1 // pred_check
      _
    $region3: #{tpu_custom_call.1} parent=1 // pred_check_branch
      %14 = sbr.rel (0) target = $region5
    $region4: #{tpu_custom_call.1} parent=1 // pred_region
      _
    $region5: #{tpu_custom_call.1} parent=1 // pred_fallthru
      _
    // Predicated region
    $region6: #{tpu_custom_call.1} parent=1 // pred_check
      _
    $region7: #{tpu_custom_call.1} parent=1 // pred_check_branch
      %16 = sbr.rel (0) target = $region9
    $region8: #{tpu_custom_call.1} parent=1 // pred_region
      _
    $region9: #{tpu_custom_call.1} parent=1 // pred_fallthru
      _
    // Predicated region
    $region10: #{tpu_custom_call.1} parent=1 // pred_check
      _
    $region11: #{tpu_custom_call.1} parent=1 // pred_check_branch
      %18 = sbr.rel (0) target = $region13
    $region12: #{tpu_custom_call.1} parent=1 // pred_region
      _
    $region13: #{tpu_custom_call.1} parent=1 // pred_fallthru
      _
    // Predicated region
    $region14: #{tpu_custom_call.1} parent=1 // pred_check
      _
    $region15: #{tpu_custom_call.1} parent=1 // pred_check_branch
      %20 = sbr.rel (0) target = $region17
    $region16: #{tpu_custom_call.1} parent=1 // pred_region
      _
    $region17: #{tpu_custom_call.1} parent=1 // pred_fallthru
      _
    // Predicated region
    $region18: #{tpu_custom_call.1} parent=1 // pred_check
      _
    $region19: #{tpu_custom_call.1} parent=1 // pred_check_branch
      %22 = sbr.rel (0) target = $region21
    $region20: #{tpu_custom_call.1} parent=1 // pred_region
      _
    $region21: #{tpu_custom_call.1} parent=1 // pred_fallthru
      _
    // Predicated region
    $region22: #{tpu_custom_call.1} parent=1 // pred_check
      _
    $region23: #{tpu_custom_call.1} parent=1 // pred_check_branch
      %24 = sbr.rel (0) target = $region25
    $region24: #{tpu_custom_call.1} parent=1 // pred_region
      _
    $region25: #{tpu_custom_call.1} parent=1 // pred_fallthru
      _
    // Predicated region
    $region26: #{tpu_custom_call.1} parent=1 // pred_check
      _
    $region27: #{tpu_custom_call.1} parent=1 // pred_check_branch
      %26 = sbr.rel (0) target = $region29
    $region28: #{tpu_custom_call.1} parent=1 // pred_region
      _
    $region29: #{tpu_custom_call.1} parent=1 // pred_fallthru
      _
    %v28 = vld [vmem:[%s6] sm:$0x1]
    %v29 = vld [vmem:[%s6 + $0x1] sm:$0x1]
    %v30 = vld [vmem:[%s6 + $0x2] sm:$0x1]
    %v31 = vld [vmem:[%s0] sm:$0xf]
    %v32 = vld [vmem:[%s4] sm:$0xf]
    %v33 = vld [vmem:[%s4 + $0x4] sm:$0xf]
    %v34 = vld [vmem:[%s4 + $0x8] sm:$0xf]
    %v35 = vld [vmem:[%s4 + $0xc] sm:$0xf]
    %v36 = vld [vmem:[%s1] sm:$0xff]
    %v37 = vld [vmem:[%s1 + $0x8] sm:$0xf]
    %v38 = vld [vmem:[%s4 + $0x10] sm:$0xf]
    %v39 = vld [vmem:[%s4 + $0x14] sm:$0xf]
    %v40 = vld [vmem:[%s4 + $0x18] sm:$0xf]
    %v41 = vld [vmem:[%s4 + $0x1c] sm:$0xf]
    %v42 = vld [vmem:[%s4 + $0x20] sm:$0xf]
    %v43 = vld [vmem:[%s4 + $0x24] sm:$0xf]
    %v44 = vld [vmem:[%s4 + $0x28] sm:$0xf]
    %v45 = vld [vmem:[%s4 + $0x2c] sm:$0xf]
    %v46 = vld [vmem:[%s4 + $0x30] sm:$0xf]
    %v47 = vld [vmem:[%s4 + $0x34] sm:$0xf]
    %v48 = vld [vmem:[%s4 + $0x38] sm:$0xf]
    %v49 = vld [vmem:[%s4 + $0x3c] sm:$0xf]
    %v50 = vld [vmem:[%s4 + $0x40] sm:$0xf]
    %v51 = vld [vmem:[%s4 + $0x44] sm:$0xf]
    %v52 = vld [vmem:[%s4 + $0x48] sm:$0xf]
    %v53 = vld [vmem:[%s4 + $0x4c] sm:$0xf]
    %v54 = vld [vmem:[%s4 + $0x50] sm:$0xf]
    %v55 = vld [vmem:[%s4 + $0x54] sm:$0xf]
    %v56 = vld [vmem:[%s4 + $0x58] sm:$0xf]
    %v57 = vld [vmem:[%s4 + $0x5c] sm:$0xf]
    %v58 = vld [vmem:[%s4 + $0x60] sm:$0xf]
    %v59 = vld [vmem:[%s4 + $0x64] sm:$0xf]
    %v60 = vld [vmem:[%s4 + $0x68] sm:$0xf]
    %v61 = vld [vmem:[%s4 + $0x6c] sm:$0xf]
    %v62 = vld [vmem:[%s4 + $0x70] sm:$0xf]
    %v63 = vld [vmem:[%s4 + $0x74] sm:$0xf]
    %v64 = vld [vmem:[%s4 + $0x78] sm:$0xf]
    %v65 = vld [vmem:[%s4 + $0x7c] sm:$0xf]
    %v66 = vld [vmem:[%s4 + $0x80] sm:$0xf]
    %v67 = vld [vmem:[%s4 + $0x84] sm:$0xf]
    %v68 = vld [vmem:[%s4 + $0x88] sm:$0xf]
    %v69 = vld [vmem:[%s4 + $0x8c] sm:$0xf]
    %v70 = vld [vmem:[%s4 + $0x90] sm:$0xf]
    %v71 = vld [vmem:[%s4 + $0x94] sm:$0xf]
    %v72 = vld [vmem:[%s4 + $0x98] sm:$0xf]
    %v73 = vld [vmem:[%s4 + $0x9c] sm:$0xf]
    %v74 = vld [vmem:[%s4 + $0xa0] sm:$0xf]
    %v75 = vld [vmem:[%s4 + $0xa4] sm:$0xf]
    %v76 = vld [vmem:[%s4 + $0xa8] sm:$0xf]
    %v77 = vld [vmem:[%s4 + $0xac] sm:$0xf]
    %v80 = vunpack.c.l.b16 %v36
    %v81 = vunpack.c.h.b16 %v36
    %v82 = vunpack.c.l.b16 %v37
    %v83 = vpack.c.b16 %v80, %v80
    %v84 = vpack.c.b16 %v81, %v81
    %v85 = vpack.c.b16 %v82, %v82
    %v128 = vunpack.c.l.b16 %v38
    %v129 = vunpack.c.l.b16 %v39
    %v130 = vunpack.c.l.b16 %v40
    %v131 = vunpack.c.l.b16 %v41
    %v132 = vunpack.c.l.b16 %v42
    %v133 = vunpack.c.l.b16 %v43
    %v134 = vunpack.c.l.b16 %v44
    %v135 = vunpack.c.l.b16 %v45
    %v136 = vunpack.c.l.b16 %v46
    %v137 = vunpack.c.l.b16 %v47
    %v138 = vunpack.c.l.b16 %v48
    %v139 = vunpack.c.l.b16 %v49
    %v140 = vunpack.c.l.b16 %v50
    %v141 = vunpack.c.l.b16 %v51
    %v142 = vunpack.c.l.b16 %v52
    %v143 = vunpack.c.l.b16 %v53
    %v144 = vunpack.c.l.b16 %v54
    %v145 = vunpack.c.l.b16 %v55
    %v146 = vunpack.c.l.b16 %v56
    %v147 = vunpack.c.l.b16 %v57
    %v148 = vunpack.c.l.b16 %v58
    %v149 = vunpack.c.l.b16 %v59
    %v150 = vunpack.c.l.b16 %v60
    %v151 = vunpack.c.l.b16 %v61
    %v152 = vunpack.c.l.b16 %v62
    %v153 = vunpack.c.l.b16 %v63
    %v154 = vunpack.c.l.b16 %v64
    %v155 = vunpack.c.l.b16 %v65
    %v156 = vunpack.c.l.b16 %v66
    %v157 = vunpack.c.l.b16 %v67
    %v158 = vunpack.c.l.b16 %v68
    %v159 = vunpack.c.l.b16 %v69
    %v160 = vunpack.c.l.b16 %v70
    %v161 = vunpack.c.l.b16 %v71
    %v162 = vunpack.c.l.b16 %v72
    %v163 = vunpack.c.l.b16 %v73
    %v164 = vunpack.c.l.b16 %v74
    %v165 = vunpack.c.l.b16 %v75
    %v166 = vunpack.c.l.b16 %v76
    %v167 = vunpack.c.l.b16 %v77
    %v168 = vpack.c.b16 %v129, %v128
    %v169 = vpack.c.b16 %v131, %v130
    %v170 = vpack.c.b16 %v133, %v132
    %v171 = vpack.c.b16 %v135, %v134
    %v172 = vpack.c.b16 %v137, %v136
    %v173 = vpack.c.b16 %v139, %v138
    %v174 = vpack.c.b16 %v141, %v140
    %v175 = vpack.c.b16 %v143, %v142
    %v176 = vpack.c.b16 %v145, %v144
    %v177 = vpack.c.b16 %v147, %v146
    %v178 = vpack.c.b16 %v149, %v148
    %v179 = vpack.c.b16 %v151, %v150
    %v180 = vpack.c.b16 %v153, %v152
    %v181 = vpack.c.b16 %v155, %v154
    %v182 = vpack.c.b16 %v157, %v156
    %v183 = vpack.c.b16 %v159, %v158
    %v184 = vpack.c.b16 %v161, %v160
    %v185 = vpack.c.b16 %v163, %v162
    %v186 = vpack.c.b16 %v165, %v164
    %v187 = vpack.c.b16 %v167, %v166
    %vm208 = vcmask 523264
    %v210 = vsel %vm208, %v85, 0
    %212 = vmatprep.subr.bf16.mxu0 0
    %213 = vmatpush1.bf16.msra.mxu0 %v175
    %214 = vmatprep.subr.bf16.mxu0 0
    %215 = vmatpush1.bf16.msra.mxu0 %v174
    %216 = vmatprep.subr.bf16.mxu0 0
    %217 = vmatpush1.bf16.msra.mxu0 %v173
    %218 = vmatprep.subr.bf16.mxu0 0
    %219 = vmatpush1.bf16.msra.mxu0 %v172
    %220 = vmatprep.subr.bf16.mxu0 0
    %221 = vmatpush1.bf16.msra.mxu0 %v171
    %222 = vmatprep.subr.bf16.mxu0 0
    %223 = vmatpush1.bf16.msra.mxu0 %v170
    %224 = vmatprep.subr.bf16.mxu0 0
    %225 = vmatpush1.bf16.msra.mxu0 %v169
    %226 = vmatprep.subr.bf16.mxu0 0
    %227 = vmatpush1.bf16.msra.mxu0 %v168
    %228 = vmatprep.subr.bf16.mxu0 0
    %229 = vmatpush2.bf16.msra.mxu0 %v183
    %230 = vmatprep.subr.bf16.mxu0 0
    %231 = vmatpush2.bf16.msra.mxu0 %v182
    %232 = vmatprep.subr.bf16.mxu0 0
    %233 = vmatpush2.bf16.msra.mxu0 %v181
    %234 = vmatprep.subr.bf16.mxu0 0
    %235 = vmatpush2.bf16.msra.mxu0 %v180
    %236 = vmatprep.subr.bf16.mxu0 0
    %237 = vmatpush2.bf16.msra.mxu0 %v179
    %238 = vmatprep.subr.bf16.mxu0 0
    %239 = vmatpush2.bf16.msra.mxu0 %v178
    %240 = vmatprep.subr.bf16.mxu0 0
    %241 = vmatpush2.bf16.msra.mxu0 %v177
    %242 = vmatprep.subr.bf16.mxu0 0
    %243 = vmatpush2.bf16.msra.mxu0 %v176
    %244 = vmatprep.mubr.bf16.mxu0 %v84
    %245 = vmatmul.mubr.bf16.gmra.mxu0 %v83
    %v246 = vpop.f32.mrf.mxu0
    %v247 = vadd.f32 0.0, %v246
    %v248 = vpop.f32.mrf.mxu0
    %v249 = vpop.f32.mrf.mxu0
    %v250 = vpop.f32.mrf.mxu0
    %251 = vdwg.mxu0
    %252 = vmatprep.subr.bf16.mxu0 0
    %253 = vmatpush1.bf16.msra.mxu0 0
    %254 = vmatprep.subr.bf16.mxu0 0
    %255 = vmatpush1.bf16.msra.mxu0 0
    %256 = vmatprep.subr.bf16.mxu0 0
    %257 = vmatpush1.bf16.msra.mxu0 0
    %258 = vmatprep.subr.bf16.mxu0 0
    %259 = vmatpush1.bf16.msra.mxu0 0
    %260 = vmatprep.subr.bf16.mxu0 0
    %261 = vmatpush1.bf16.msra.mxu0 %v187
    %262 = vmatprep.subr.bf16.mxu0 0
    %263 = vmatpush1.bf16.msra.mxu0 %v186
    %264 = vmatprep.subr.bf16.mxu0 0
    %265 = vmatpush1.bf16.msra.mxu0 %v185
    %266 = vmatprep.subr.bf16.mxu0 0
    %267 = vmatpush1.bf16.msra.mxu0 %v184
    %268 = vmatprep.subr.bf16.mxu0 0
    %269 = vmatpush2.bf16.msra.mxu0 0
    %270 = vmatprep.subr.bf16.mxu0 0
    %271 = vmatpush2.bf16.msra.mxu0 0
    %272 = vmatprep.subr.bf16.mxu0 0
    %273 = vmatpush2.bf16.msra.mxu0 0
    %274 = vmatprep.subr.bf16.mxu0 0
    %275 = vmatpush2.bf16.msra.mxu0 0
    %276 = vmatprep.subr.bf16.mxu0 0
    %277 = vmatpush2.bf16.msra.mxu0 0
    %278 = vmatprep.subr.bf16.mxu0 0
    %279 = vmatpush2.bf16.msra.mxu0 0
    %280 = vmatprep.subr.bf16.mxu0 0
    %281 = vmatpush2.bf16.msra.mxu0 0
    %282 = vmatprep.subr.bf16.mxu0 0
    %283 = vmatpush2.bf16.msra.mxu0 0
    %284 = vmatprep.mubr.bf16.mxu0 0
    %285 = vmatmul.mubr.bf16.gmra.mxu0 %v210
    %v286 = vpop.f32.mrf.mxu0
    %v287 = vadd.f32 %v247, %v286
    %v288 = vpop.f32.mrf.mxu0
    %v289 = vpop.f32.mrf.mxu0
    %v290 = vpop.f32.mrf.mxu0
    %291 = vdwg.mxu0
    %v296 = vunpack.c.l.b16 %v32
    %v297 = vunpack.c.l.b16 %v33
    %v298 = vunpack.c.l.b16 %v34
    %v299 = vunpack.c.l.b16 %v35
    %v300 = vpack.c.b16 %v297, %v296
    %v301 = vpack.c.b16 %v299, %v298
    %vm304 = vcmask 261120
    %v306 = vsel %vm304, %v31, 0
    %308 = vmatprep.subr.bf16.mxu0 0
    %309 = vmatpush1.bf16.msra.mxu0 0
    %310 = vmatprep.subr.bf16.mxu0 0
    %311 = vmatpush1.bf16.msra.mxu0 0
    %312 = vmatprep.subr.bf16.mxu0 0
    %313 = vmatpush1.bf16.msra.mxu0 0
    %314 = vmatprep.subr.bf16.mxu0 0
    %315 = vmatpush1.bf16.msra.mxu0 0
    %316 = vmatprep.subr.bf16.mxu0 0
    %317 = vmatpush1.bf16.msra.mxu0 0
    %318 = vmatprep.subr.bf16.mxu0 0
    %319 = vmatpush1.bf16.msra.mxu0 0
    %320 = vmatprep.subr.bf16.mxu0 0
    %321 = vmatpush1.bf16.msra.mxu0 %v301
    %322 = vmatprep.subr.bf16.mxu0 0
    %323 = vmatpush1.bf16.msra.mxu0 %v300
    %324 = vmatprep.subr.bf16.mxu0 0
    %325 = vmatpush2.bf16.msra.mxu0 0
    %326 = vmatprep.subr.bf16.mxu0 0
    %327 = vmatpush2.bf16.msra.mxu0 0
    %328 = vmatprep.subr.bf16.mxu0 0
    %329 = vmatpush2.bf16.msra.mxu0 0
    %330 = vmatprep.subr.bf16.mxu0 0
    %331 = vmatpush2.bf16.msra.mxu0 0
    %332 = vmatprep.subr.bf16.mxu0 0
    %333 = vmatpush2.bf16.msra.mxu0 0
    %334 = vmatprep.subr.bf16.mxu0 0
    %335 = vmatpush2.bf16.msra.mxu0 0
    %336 = vmatprep.subr.bf16.mxu0 0
    %337 = vmatpush2.bf16.msra.mxu0 0
    %338 = vmatprep.subr.bf16.mxu0 0
    %339 = vmatpush2.bf16.msra.mxu0 0
    %340 = vmatprep.mubr.bf16.mxu0 0
    %341 = vmatmul.mubr.bf16.gmra.mxu0 %v306
    %v342 = vpop.f32.mrf.mxu0
    %v343 = vadd.f32 %v287, %v342
    %v344 = vpop.f32.mrf.mxu0
    %v345 = vpop.f32.mrf.mxu0
    %v346 = vpop.f32.mrf.mxu0
    %347 = vdwg.mxu0
    %v348 = vlaneseq
    %v349 = vshrl.u32 %v348, 7
    %v350 = vsub.s32 0, %v349
    %v351 = vrot.slane %v28, %v350
    %v352 = vadd.f32 %v343, %v351
    %v353 = vmax.f32 %v352, 0.0
    %v354 = vpack.c.bf16 %v353, %v353
    %v355 = vld [vmem:[%s5] sm:$0xf]
    %v356 = vld [vmem:[%s5 + $0x4] sm:$0xf]
    %v357 = vld [vmem:[%s5 + $0x8] sm:$0xf]
    %v358 = vld [vmem:[%s5 + $0xc] sm:$0xf]
    %v359 = vld [vmem:[%s2] sm:$0xf]
    %v360 = vld [vmem:[%s5 + $0x10] sm:$0xf]
    %v361 = vld [vmem:[%s5 + $0x14] sm:$0xf]
    %v362 = vld [vmem:[%s5 + $0x18] sm:$0xf]
    %v363 = vld [vmem:[%s5 + $0x1c] sm:$0xf]
    %v368 = vunpack.c.l.b16 %v360
    %v369 = vunpack.c.l.b16 %v361
    %v370 = vunpack.c.l.b16 %v362
    %v371 = vunpack.c.l.b16 %v363
    %v372 = vpack.c.b16 %v369, %v368
    %v373 = vpack.c.b16 %v371, %v370
    %v377 = vsel %vm304, %v359, 0
    %379 = vmatprep.subr.bf16.mxu0 0
    %380 = vmatpush1.bf16.msra.mxu0 0
    %381 = vmatprep.subr.bf16.mxu0 0
    %382 = vmatpush1.bf16.msra.mxu0 0
    %383 = vmatprep.subr.bf16.mxu0 0
    %384 = vmatpush1.bf16.msra.mxu0 0
    %385 = vmatprep.subr.bf16.mxu0 0
    %386 = vmatpush1.bf16.msra.mxu0 0
    %387 = vmatprep.subr.bf16.mxu0 0
    %388 = vmatpush1.bf16.msra.mxu0 0
    %389 = vmatprep.subr.bf16.mxu0 0
    %390 = vmatpush1.bf16.msra.mxu0 0
    %391 = vmatprep.subr.bf16.mxu0 0
    %392 = vmatpush1.bf16.msra.mxu0 %v373
    %393 = vmatprep.subr.bf16.mxu0 0
    %394 = vmatpush1.bf16.msra.mxu0 %v372
    %395 = vmatprep.subr.bf16.mxu0 0
    %396 = vmatpush2.bf16.msra.mxu0 0
    %397 = vmatprep.subr.bf16.mxu0 0
    %398 = vmatpush2.bf16.msra.mxu0 0
    %399 = vmatprep.subr.bf16.mxu0 0
    %400 = vmatpush2.bf16.msra.mxu0 0
    %401 = vmatprep.subr.bf16.mxu0 0
    %402 = vmatpush2.bf16.msra.mxu0 0
    %403 = vmatprep.subr.bf16.mxu0 0
    %404 = vmatpush2.bf16.msra.mxu0 0
    %405 = vmatprep.subr.bf16.mxu0 0
    %406 = vmatpush2.bf16.msra.mxu0 0
    %407 = vmatprep.subr.bf16.mxu0 0
    %408 = vmatpush2.bf16.msra.mxu0 0
    %409 = vmatprep.subr.bf16.mxu0 0
    %410 = vmatpush2.bf16.msra.mxu0 0
    %411 = vmatprep.mubr.bf16.mxu0 0
    %412 = vmatmul.mubr.bf16.gmra.mxu0 %v377
    %v413 = vpop.f32.mrf.mxu0
    %v414 = vadd.f32 0.0, %v413
    %v415 = vpop.f32.mrf.mxu0
    %v416 = vpop.f32.mrf.mxu0
    %v417 = vpop.f32.mrf.mxu0
    %418 = vdwg.mxu0
    %v423 = vunpack.c.l.b16 %v355
    %v424 = vunpack.c.l.b16 %v356
    %v425 = vunpack.c.l.b16 %v357
    %v426 = vunpack.c.l.b16 %v358
    %v427 = vpack.c.b16 %v424, %v423
    %v428 = vpack.c.b16 %v426, %v425
    %v432 = vsel %vm304, %v354, 0
    %434 = vmatprep.subr.bf16.mxu0 0
    %435 = vmatpush1.bf16.msra.mxu0 0
    %436 = vmatprep.subr.bf16.mxu0 0
    %437 = vmatpush1.bf16.msra.mxu0 0
    %438 = vmatprep.subr.bf16.mxu0 0
    %439 = vmatpush1.bf16.msra.mxu0 0
    %440 = vmatprep.subr.bf16.mxu0 0
    %441 = vmatpush1.bf16.msra.mxu0 0
    %442 = vmatprep.subr.bf16.mxu0 0
    %443 = vmatpush1.bf16.msra.mxu0 0
    %444 = vmatprep.subr.bf16.mxu0 0
    %445 = vmatpush1.bf16.msra.mxu0 0
    %446 = vmatprep.subr.bf16.mxu0 0
    %447 = vmatpush1.bf16.msra.mxu0 %v428
    %448 = vmatprep.subr.bf16.mxu0 0
    %449 = vmatpush1.bf16.msra.mxu0 %v427
    %450 = vmatprep.subr.bf16.mxu0 0
    %451 = vmatpush2.bf16.msra.mxu0 0
    %452 = vmatprep.subr.bf16.mxu0 0
    %453 = vmatpush2.bf16.msra.mxu0 0
    %454 = vmatprep.subr.bf16.mxu0 0
    %455 = vmatpush2.bf16.msra.mxu0 0
    %456 = vmatprep.subr.bf16.mxu0 0
    %457 = vmatpush2.bf16.msra.mxu0 0
    %458 = vmatprep.subr.bf16.mxu0 0
    %459 = vmatpush2.bf16.msra.mxu0 0
    %460 = vmatprep.subr.bf16.mxu0 0
    %461 = vmatpush2.bf16.msra.mxu0 0
    %462 = vmatprep.subr.bf16.mxu0 0
    %463 = vmatpush2.bf16.msra.mxu0 0
    %464 = vmatprep.subr.bf16.mxu0 0
    %465 = vmatpush2.bf16.msra.mxu0 0
    %466 = vmatprep.mubr.bf16.mxu0 0
    %467 = vmatmul.mubr.bf16.gmra.mxu0 %v432
    %v468 = vpop.f32.mrf.mxu0
    %v469 = vadd.f32 %v414, %v468
    %v470 = vpop.f32.mrf.mxu0
    %v471 = vpop.f32.mrf.mxu0
    %v472 = vpop.f32.mrf.mxu0
    %473 = vdwg.mxu0
    %v474 = vlaneseq
    %v475 = vshrl.u32 %v474, 7
    %v476 = vsub.s32 0, %v475
    %v477 = vrot.slane %v29, %v476
    %v478 = vadd.f32 %v469, %v477
    %v479 = vxor.u32 %v478, 2147483648
    %v480 = vmul.f32 %v479, 1.442695
    %v481 = vpow.pop %v480
    %v482 = vadd.f32 %v481, 1.0
    %v483 = vrcp.pop %v482
    %v484 = vmul.f32 1.0, %v483
    %v485 = vtanh.pop %v478
    %v486 = vld [vmem:[%s3] sm:$0xff]
    %488 = vrot.lane.b32.xlu0 %v486, 32
    %v489 = vpop.permute.xlu0 %488
    %v491 = vmul.f32 %v484, %v489
    %493 = vrot.lane.b32.xlu0 %v485, 32
    %v494 = vpop.permute.xlu0 %493
    %v496 = vmul.f32 %v484, %v494
    %498 = vrot.lane.b32.xlu0 %v496, 32
    %v499 = vpop.permute.xlu0 %498
    %v501 = vadd.f32 %v491, %v499
    %v502 = vtanh.pop %v501
    %504 = vrot.lane.b32.xlu0 %v502, 32
    %v505 = vpop.permute.xlu0 %504
    %v507 = vmul.f32 %v484, %v505
    %v508 = vpack.c.bf16 %v507, %v507
    %v509 = vld [vmem:[%s5 + $0x20] sm:$0xf]
    %v510 = vld [vmem:[%s5 + $0x24] sm:$0xf]
    %v511 = vld [vmem:[%s5 + $0x28] sm:$0xf]
    %v512 = vld [vmem:[%s5 + $0x2c] sm:$0xf]
    %v513 = vlaneseq
    %v514 = vshrl.u32 %v513, 7
    %v515 = vsub.s32 0, %v514
    %v516 = vrot.slane %v30, %v515
    %518 = vrot.lane.b32.xlu0 %v508, 64
    %v519 = vpop.permute.xlu0 %518
    %v524 = vunpack.c.l.b16 %v509
    %v525 = vunpack.c.l.b16 %v510
    %v526 = vunpack.c.l.b16 %v511
    %v527 = vunpack.c.l.b16 %v512
    %v528 = vpack.c.b16 %v525, %v524
    %v529 = vpack.c.b16 %v527, %v526
    %v533 = vsel %vm304, %v519, 0
    %535 = vmatprep.subr.bf16.mxu0 0
    %536 = vmatpush1.bf16.msra.mxu0 0
    %537 = vmatprep.subr.bf16.mxu0 0
    %538 = vmatpush1.bf16.msra.mxu0 0
    %539 = vmatprep.subr.bf16.mxu0 0
    %540 = vmatpush1.bf16.msra.mxu0 0
    %541 = vmatprep.subr.bf16.mxu0 0
    %542 = vmatpush1.bf16.msra.mxu0 0
    %543 = vmatprep.subr.bf16.mxu0 0
    %544 = vmatpush1.bf16.msra.mxu0 0
    %545 = vmatprep.subr.bf16.mxu0 0
    %546 = vmatpush1.bf16.msra.mxu0 0
    %547 = vmatprep.subr.bf16.mxu0 0
    %548 = vmatpush1.bf16.msra.mxu0 %v529
    %549 = vmatprep.subr.bf16.mxu0 0
    %550 = vmatpush1.bf16.msra.mxu0 %v528
    %551 = vmatprep.subr.bf16.mxu0 0
    %552 = vmatpush2.bf16.msra.mxu0 0
    %553 = vmatprep.subr.bf16.mxu0 0
    %554 = vmatpush2.bf16.msra.mxu0 0
    %555 = vmatprep.subr.bf16.mxu0 0
    %556 = vmatpush2.bf16.msra.mxu0 0
    %557 = vmatprep.subr.bf16.mxu0 0
    %558 = vmatpush2.bf16.msra.mxu0 0
    %559 = vmatprep.subr.bf16.mxu0 0
    %560 = vmatpush2.bf16.msra.mxu0 0
    %561 = vmatprep.subr.bf16.mxu0 0
    %562 = vmatpush2.bf16.msra.mxu0 0
    %563 = vmatprep.subr.bf16.mxu0 0
    %564 = vmatpush2.bf16.msra.mxu0 0
    %565 = vmatprep.subr.bf16.mxu0 0
    %566 = vmatpush2.bf16.msra.mxu0 0
    %567 = vmatprep.mubr.bf16.mxu0 0
    %568 = vmatmul.mubr.bf16.gmra.mxu0 %v533
    %v569 = vpop.f32.mrf.mxu0
    %v570 = vadd.f32 %v516, %v569
    %v571 = vpop.f32.mrf.mxu0
    %v572 = vpop.f32.mrf.mxu0
    %v573 = vpop.f32.mrf.mxu0
    %574 = vdwg.mxu0
    %v575 = vlaneseq
    %v576 = vand.u32 %v575, 127
    %vm577 = vcmp.lt.s32.totalorder %v576, 2
    %v578 = vsel %vm577, %v570, -1e+30
    %579 = vmax.xlane.f32.xlu0 %v578
    %v580 = vpop.xlane.xlu0 %579
    %v581 = vsub.f32 %v578, %v580
    %v582 = vmul.f32 %v581, 1.442695
    %v583 = vpow.pop %v582
    %584 = vadd.xlane.f32.xlu0 %v583
    %v585 = vpop.xlane.xlu0 %584
    %v586 = vlog2.pop %v585
    %v587 = vmul.f32 %v586, 0.6931472
    %v588 = vadd.f32 %v580, %v587
    %v589 = vsub.f32 %v570, %v588
    %591 = vrot.lane.b32.xlu0 %v507, 66
    %v592 = vpop.permute.xlu0 %591
    %595 = vrot.lane.b32.xlu0 %v501, 2
    %v596 = vpop.permute.xlu0 %595
    %vm598 = vcmask 15360
    %v599 = vsel %vm598, %v589, %v592
    %vm600 = vcmask 277504
    %v601 = vsel %vm600, %v599, %v596
    %vm602 = vcmask 539648
    %v603 = vsel %vm602, %v601, 0.0
    %604 = vst [vmem:[#allocation2] sm:$0xff] %v603
    // Predicated region
    $region30: #{tpu_custom_call.1} parent=1 // pred_check
      _
    $region31: #{tpu_custom_call.1} parent=1 // pred_check_branch
      %606 = sbr.rel (0) target = $region33
    $region32: #{tpu_custom_call.1} parent=1 // pred_region
      %s608 = ssub.s32 128, 128
      %609 = vsyncadd [#allocation3], %s608
      %s611 = sshll.u32 [#allocation2], 4
      %s612 = int_to_ptr.vmem [resolvable:$true] %s611
      %614 = dma.vmem_to_hbm [thread:$0]  %s612, 128, %s7, [#allocation3]
    $region33: #{tpu_custom_call.1} parent=1 // pred_fallthru
      _
    // Predicated region
    $region34: #{tpu_custom_call.1} parent=1 // pred_check
      _
    $region35: #{tpu_custom_call.1} parent=1 // pred_check_branch
      %616 = sbr.rel (0) target = $region37
    $region36: #{tpu_custom_call.1} parent=1 // pred_region
      %617 = dma.done [#allocation3], 128
    $region37: #{tpu_custom_call.1} parent=1 // pred_fallthru
      _
    %618 = vsyncpa [#allocation3], 1

</llo_original>
